<compile_context>
chip_gen: v7x
topology: tpu7x:2x2x1
jax: 0.10.0
libtpu: 0.0.40
codegen_flags: <defaults>
</compile_context>

<pallas_src>
import jax
import jax.numpy as jnp
from jax.experimental import pallas as pl
from jax.experimental.pallas import tpu as pltpu


def _self_attention_kernel(x_ref, wqkv_ref, bqkv_ref, o_ref):
    # x_ref:    (TB, S, H)  float32   (H already padded to a multiple of 128)
    # wqkv_ref: (H, 3H)     bfloat16  (Wq^T*scale | Wk^T | Wv^T)
    # bqkv_ref: (1, 3H)     float32   (bq*scale | bk | bv)
    TB, S, H = x_ref.shape

    x = x_ref[...]                                   # (TB, S, H) f32, kept for residual
    w = wqkv_ref[...]                                # (H, 3H) bf16
    b = bqkv_ref[...]                                # (1, 3H) f32

    # ---- Fused QKV projection: one tall MXU matmul, bf16 operands, f32 acc ----
    if TB == 1 or S % 8 == 0:
        # Tile-aligned flatten (f32 reshape is a pure tile relabeling).
        x2 = x.reshape(TB * S, H).astype(jnp.bfloat16)          # (TB*S, H) bf16
        qkv = jnp.dot(x2, w, preferred_element_type=jnp.float32)  # (TB*S, 3H) f32
        qkv = (qkv + b).reshape(TB, S, 3 * H)
    else:
        # Fallback: batched einsum (flatten would need a relayout copy).
        qkv = jnp.einsum("bsh,hd->bsd", x.astype(jnp.bfloat16), w,
                         preferred_element_type=jnp.float32) + b
    qkv = qkv.astype(jnp.bfloat16)                   # single bf16 cast; f32 qkv dies here

    q = qkv[:, :, :H]                                # scale already folded into Wq / bq
    k = qkv[:, :, H:2 * H]
    v = qkv[:, :, 2 * H:]

    # scores = q @ k^T (contract last dims directly; no materialized transpose)
    s = jnp.einsum("bqh,bkh->bqk", q, k,
                   preferred_element_type=jnp.float32)           # (TB, S, S) f32

    # softmax along the last axis (f32 on the VPU; exp on EUP)
    m = jnp.max(s, axis=-1, keepdims=True)
    p = jnp.exp(s - m)
    denom = jnp.sum(p, axis=-1, keepdims=True)
    inv = pl.reciprocal(denom, approx=True)                      # (TB, S, 1)

    if S > H:
        # Defer normalization past PV: (S,H)-sized multiply instead of (S,S).
        pv = jnp.einsum("bqk,bkh->bqh", p.astype(jnp.bfloat16), v,
                        preferred_element_type=jnp.float32)      # (TB, S, H) f32
        o_ref[...] = (pv * inv + x).astype(o_ref.dtype)
    else:
        attn = (p * inv).astype(jnp.bfloat16)
        pv = jnp.einsum("bqk,bkh->bqh", attn, v,
                        preferred_element_type=jnp.float32)      # (TB, S, H) f32
        o_ref[...] = (pv + x).astype(o_ref.dtype)


def _round_up(x, m):
    return ((x + m - 1) // m) * m


def _pick_batch_tile(B, S, H):
    """Pick batch tile TB (and vmem_limit_bytes) from the actual generation's VMEM."""
    try:
        vmem_cap = int(pltpu.get_tpu_info().vmem_capacity_bytes)
    except Exception:
        vmem_cap = 64 << 20          # conservative default (v7x per-TensorCore)

    # Resident (single-buffered) fused weights + bias.
    weight_bytes = H * (3 * H) * 2 + (3 * H) * 4
    # Per-batch-element footprint:
    #   double-buffered f32 in/out x blocks: 16*S*H
    #   live kernel activations (x, x_bf, qkv f32 acc, qkv bf16, pv): ~28*S*H
    #   scores s/p/attn: ~10*S*S
    per_batch = 44 * S * H + 10 * S * S
    budget = int(0.7 * (vmem_cap - weight_bytes))

    best = None
    for tb in range(1, B + 1):
        if B % tb:
            continue
        if B >= 2 and B // tb < 2:   # keep grid >= 2: v7x has 2 TensorCores ("parallel")
            continue
        if tb * per_batch <= budget:
            best = tb
    if best is None:
        best = 1
        # TODO(synk): flash-style S tiling (online softmax over KV chunks) when even a
        # single batch element's (S,S) score tile overflows VMEM (bites v7x first).

    vmem_limit = weight_bytes + best * per_batch + (16 << 20)
    vmem_limit = max(32 << 20, min(vmem_limit, vmem_cap))
    return best, int(vmem_limit)


def self_attention_pallas(x, wq, bq, wk, bk, wv, bv, scale):
    """x: (B, S, H) or (B, H). Weights are torch-style (out, in); biases (out,)."""
    squeezed = False
    if x.ndim == 2:
        x = x[:, None, :]            # mirrors unsqueeze(1)
        squeezed = True
    B, S, H = x.shape

    # Lane-dense padding: hidden dim -> multiple of 128. Zero-padded weight rows/cols
    # and biases make the padded lanes exactly zero everywhere (scores, V, residual),
    # so slicing [..., :H] afterwards is exact.
    Hp = _round_up(max(H, 128), 128)
    if Hp != H:
        ph = Hp - H
        x_p = jnp.pad(x, ((0, 0), (0, 0), (0, ph)))
        wq = jnp.pad(wq, ((0, ph), (0, ph)))
        wk = jnp.pad(wk, ((0, ph), (0, ph)))
        wv = jnp.pad(wv, ((0, ph), (0, ph)))
        bq = jnp.pad(bq, ((0, ph),))
        bk = jnp.pad(bk, ((0, ph),))
        bv = jnp.pad(bv, ((0, ph),))
    else:
        x_p = x

    # Host-side weight prep: transpose to (in, out), fold scale into Q, fuse, cast bf16.
    w_qkv = jnp.concatenate([wq.T * scale, wk.T, wv.T], axis=1).astype(jnp.bfloat16)  # (Hp, 3Hp)
    b_qkv = jnp.concatenate([bq * scale, bk, bv])[None, :].astype(jnp.float32)        # (1, 3Hp)

    TB, vmem_limit = _pick_batch_tile(B, S, Hp)
    grid = (B // TB,)

    itemsize = jnp.dtype(x.dtype).itemsize
    cost = pl.CostEstimate(
        flops=B * (6 * S * Hp * Hp + 4 * S * S * Hp),
        transcendentals=B * S * S,
        bytes_accessed=2 * B * S * Hp * itemsize + w_qkv.size * 2 + b_qkv.size * 4,
    )

    def make_call(single_buffer_weights):
        resident = dict(pipeline_mode=pl.Buffered(1)) if single_buffer_weights else {}
        return pl.pallas_call(
            _self_attention_kernel,
            out_shape=jax.ShapeDtypeStruct((B, S, Hp), x.dtype),
            grid_spec=pltpu.PrefetchScalarGridSpec(
                num_scalar_prefetch=0,
                grid=grid,
                in_specs=[
                    pl.BlockSpec((TB, S, Hp), lambda b: (b, 0, 0)),            # x
                    pl.BlockSpec((Hp, 3 * Hp), lambda b: (0, 0), **resident),  # fused W_qkv (bf16)
                    pl.BlockSpec((1, 3 * Hp), lambda b: (0, 0), **resident),   # fused b_qkv (f32)
                ],
                out_specs=pl.BlockSpec((TB, S, Hp), lambda b: (b, 0, 0)),
            ),
            compiler_params=pltpu.CompilerParams(
                dimension_semantics=("parallel",),
                vmem_limit_bytes=vmem_limit),
            cost_estimate=cost,
        )

    try:
        out = make_call(True)(x_p, w_qkv, b_qkv)
    except Exception:
        # pipeline_mode / Buffered(1) not supported on this jax version: default buffering.
        out = make_call(False)(x_p, w_qkv, b_qkv)

    out = out[..., :H]
    if squeezed:
        out = out[:, 0, :]
    return out


def _init_params(key, hidden_dims):
    """Deterministic init mirroring the module's __init__ shapes."""
    kq, kk, kv, kbq, kbk, kbv = jax.random.split(key, 6)
    # xavier_uniform_ for Q/K/V weights: U(-a, a), a = sqrt(6/(fan_in+fan_out))
    a = (6.0 / (hidden_dims + hidden_dims)) ** 0.5
    wq = jax.random.uniform(kq, (hidden_dims, hidden_dims), jnp.float32, -a, a)
    wk = jax.random.uniform(kk, (hidden_dims, hidden_dims), jnp.float32, -a, a)
    wv = jax.random.uniform(kv, (hidden_dims, hidden_dims), jnp.float32, -a, a)
    # default torch Linear bias init: U(-1/sqrt(fan_in), 1/sqrt(fan_in))
    bnd = 1.0 / (hidden_dims ** 0.5)
    bq = jax.random.uniform(kbq, (hidden_dims,), jnp.float32, -bnd, bnd)
    bk = jax.random.uniform(kbk, (hidden_dims,), jnp.float32, -bnd, bnd)
    bv = jax.random.uniform(kbv, (hidden_dims,), jnp.float32, -bnd, bnd)
    return wq, bq, wk, bk, wv, bv


def _reference(x, wq, bq, wk, bk, wv, bv, scale):
    """Pure-JAX f32 reference of the PyTorch forward (eval mode)."""
    if x.ndim == 2:
        x = x[:, None, :]
        squeeze = True
    else:
        squeeze = False
    q = jnp.einsum("bsh,oh->bso", x, wq) + bq
    k = jnp.einsum("bsh,oh->bso", x, wk) + bk
    v = jnp.einsum("bsh,oh->bso", x, wv) + bv
    s = jnp.einsum("bqh,bkh->bqk", q, k) * scale
    attn = jax.nn.softmax(s, axis=-1)
    out = jnp.einsum("bqk,bkh->bqh", attn, v) + x
    if squeeze:
        out = out[:, 0, :]
    return out


if __name__ == "__main__":
    hidden_dims = 32
    B, S = 2, 8
    key = jax.random.PRNGKey(0)
    kx, kp = jax.random.split(key)

    x = jax.random.normal(kx, (B, S, hidden_dims), dtype=jnp.float32)
    wq, bq, wk, bk, wv, bv = _init_params(kp, hidden_dims)
    scale = hidden_dims ** (-0.5)

    out = self_attention_pallas(x, wq, bq, wk, bk, wv, bv, scale)
    out = jax.block_until_ready(out)

    ref = _reference(x, wq, bq, wk, bk, wv, bv, scale)
    assert out.shape == (B, S, hidden_dims)
    # bf16 MXU operands (f32 accumulate) + approx reciprocal -> compare against the
    # f32 reference with a correspondingly looser tolerance.
    assert jnp.allclose(out, ref, atol=5e-2, rtol=5e-2), \
        f"max abs err {float(jnp.max(jnp.abs(out - ref)))}"

    print("KERNEL_OK")
</pallas_src>

<mosaic_0001>
module attributes {stable_mosaic.version = 11 : i64} {
  func.func @_self_attention_kernel(%arg0: i32, %arg1: memref<1x8x128xf32, #tpu.memory_space<vmem>>, %arg2: memref<128x384xbf16, #tpu.memory_space<vmem>>, %arg3: memref<1x384xf32, #tpu.memory_space<vmem>>, %arg4: memref<1x8x128xf32, #tpu.memory_space<vmem>>) attributes {dimension_semantics = [#tpu.dimension_semantics<parallel>], iteration_bounds = array<i64: 2>, scalar_prefetch = 0 : i64, scratch_operands = 0 : i64, tpu.core_type = #tpu.core_type<tc>, window_params = [{transform_indices = @transform_0, window_bounds = array<i64: 1, 8, 128>}, {pipeline_mode = #tpu.pipeline_mode<synchronous>, transform_indices = @transform_1, window_bounds = array<i64: 128, 384>}, {pipeline_mode = #tpu.pipeline_mode<synchronous>, transform_indices = @transform_2, window_bounds = array<i64: 1, 384>}, {transform_indices = @transform_3, window_bounds = array<i64: 1, 8, 128>}]} {
    %c0 = arith.constant 0 : index
    %c0_0 = arith.constant 0 : index
    %c0_1 = arith.constant 0 : index
    %0 = vector.load %arg1[%c0, %c0_0, %c0_1] : memref<1x8x128xf32, #tpu.memory_space<vmem>>, vector<1x8x128xf32>
    %c0_2 = arith.constant 0 : index
    %c0_3 = arith.constant 0 : index
    %1 = vector.load %arg2[%c0_2, %c0_3] : memref<128x384xbf16, #tpu.memory_space<vmem>>, vector<128x384xbf16>
    %c0_4 = arith.constant 0 : index
    %c0_5 = arith.constant 0 : index
    %2 = vector.load %arg3[%c0_4, %c0_5] : memref<1x384xf32, #tpu.memory_space<vmem>>, vector<1x384xf32>
    %3 = vector.shape_cast %0 : vector<1x8x128xf32> to vector<8x128xf32>
    %4 = arith.truncf %3 : vector<8x128xf32> to vector<8x128xbf16>
    %cst = arith.constant dense<0.000000e+00> : vector<8x384xf32>
    %5 = tpu.matmul %4, %1, %cst {dimension_numbers = #tpu.dot_dimension_numbers<[1], [0], [0], [1], [0, 0, 1, 1], [], []>} : vector<8x128xbf16>, vector<128x384xbf16>, vector<8x384xf32> -> vector<8x384xf32>
    %6 = vector.broadcast %2 : vector<1x384xf32> to vector<8x384xf32>
    %7 = arith.addf %5, %6 : vector<8x384xf32>
    %8 = vector.shape_cast %7 : vector<8x384xf32> to vector<1x8x384xf32>
    %9 = arith.truncf %8 : vector<1x8x384xf32> to vector<1x8x384xbf16>
    %10 = vector.extract_strided_slice %9 {offsets = [0, 0, 0], sizes = [1, 8, 128], strides = [1, 1, 1]} : vector<1x8x384xbf16> to vector<1x8x128xbf16>
    %11 = vector.extract_strided_slice %9 {offsets = [0, 0, 128], sizes = [1, 8, 128], strides = [1, 1, 1]} : vector<1x8x384xbf16> to vector<1x8x128xbf16>
    %12 = vector.extract_strided_slice %9 {offsets = [0, 0, 256], sizes = [1, 8, 128], strides = [1, 1, 1]} : vector<1x8x384xbf16> to vector<1x8x128xbf16>
    "tpu.trace_start"() <{level = 10 : i32, message = "bqh,bkh->bqk"}> : () -> ()
    %cst_6 = arith.constant dense<0.000000e+00> : vector<1x8x8xf32>
    %13 = tpu.matmul %10, %11, %cst_6 {dimension_numbers = #tpu.dot_dimension_numbers<[2], [2], [1], [1], [0, 0, 0, 1, 1, 1], [0], [0]>} : vector<1x8x128xbf16>, vector<1x8x128xbf16>, vector<1x8x8xf32> -> vector<1x8x8xf32>
    "tpu.trace_stop"() : () -> ()
    %cst_7 = arith.constant dense<0xFF800000> : vector<1x8xf32>
    %14 = vector.multi_reduction <maximumf>, %13, %cst_7 [2] : vector<1x8x8xf32> to vector<1x8xf32>
    %15 = vector.shape_cast %14 : vector<1x8xf32> to vector<1x8x1xf32>
    %16 = vector.broadcast %15 : vector<1x8x1xf32> to vector<1x8x8xf32>
    %17 = arith.subf %13, %16 : vector<1x8x8xf32>
    %18 = math.exp %17 : vector<1x8x8xf32>
    %cst_8 = arith.constant dense<0.000000e+00> : vector<1x8xf32>
    %19 = vector.multi_reduction <add>, %18, %cst_8 [2] : vector<1x8x8xf32> to vector<1x8xf32>
    %20 = vector.shape_cast %19 : vector<1x8xf32> to vector<1x8x1xf32>
    %21 = tpu.reciprocal %20 {approx = true} : vector<1x8x1xf32> -> vector<1x8x1xf32>
    %22 = vector.broadcast %21 : vector<1x8x1xf32> to vector<1x8x8xf32>
    %23 = arith.mulf %18, %22 : vector<1x8x8xf32>
    %24 = arith.truncf %23 : vector<1x8x8xf32> to vector<1x8x8xbf16>
    "tpu.trace_start"() <{level = 10 : i32, message = "bqk,bkh->bqh"}> : () -> ()
    %cst_9 = arith.constant dense<0.000000e+00> : vector<1x8x128xf32>
    %25 = tpu.matmul %24, %12, %cst_9 {dimension_numbers = #tpu.dot_dimension_numbers<[2], [1], [1], [2], [0, 0, 0, 1, 1, 2], [0], [0]>} : vector<1x8x8xbf16>, vector<1x8x128xbf16>, vector<1x8x128xf32> -> vector<1x8x128xf32>
    "tpu.trace_stop"() : () -> ()
    %26 = arith.addf %25, %0 : vector<1x8x128xf32>
    %c0_10 = arith.constant 0 : index
    %c0_11 = arith.constant 0 : index
    %c0_12 = arith.constant 0 : index
    %27 = vector.load %arg4[%c0_10, %c0_11, %c0_12] : memref<1x8x128xf32, #tpu.memory_space<vmem>>, vector<1x8x128xf32>
    tpu.vector_store %arg4[%c0_10, %c0_11, %c0_12], %26 {strides = array<i32>} : memref<1x8x128xf32, #tpu.memory_space<vmem>>, vector<1x8x128xf32>,
    return
  }
  func.func @transform_0(%arg0: i32) -> (i32, i32, i32) {
    %c0_i32 = arith.constant 0 : i32
    %c0_i32_0 = arith.constant 0 : i32
    %c0_i32_1 = arith.constant 0 : i32
    return %arg0, %c0_i32, %c0_i32_0 : i32, i32, i32
  }
  func.func @transform_1(%arg0: i32) -> (i32, i32) {
    %c0_i32 = arith.constant 0 : i32
    %c0_i32_0 = arith.constant 0 : i32
    %c0_i32_1 = arith.constant 0 : i32
    return %c0_i32, %c0_i32_0 : i32, i32
  }
  func.func @transform_2(%arg0: i32) -> (i32, i32) {
    %c0_i32 = arith.constant 0 : i32
    %c0_i32_0 = arith.constant 0 : i32
    %c0_i32_1 = arith.constant 0 : i32
    return %c0_i32, %c0_i32_0 : i32, i32
  }
  func.func @transform_3(%arg0: i32) -> (i32, i32, i32) {
    %c0_i32 = arith.constant 0 : i32
    %c0_i32_0 = arith.constant 0 : i32
    %c0_i32_1 = arith.constant 0 : i32
    return %arg0, %c0_i32, %c0_i32_0 : i32, i32, i32
  }
}

module attributes {stable_mosaic.version = 11 : i64} {
  func.func @_self_attention_kernel(%arg0: i32, %arg1: memref<1x8x128xf32, #tpu.memory_space<vmem>>, %arg2: memref<128x384xbf16, #tpu.memory_space<vmem>>, %arg3: memref<1x384xf32, #tpu.memory_space<vmem>>, %arg4: memref<1x8x128xf32, #tpu.memory_space<vmem>>) attributes {dimension_semantics = [#tpu.dimension_semantics<parallel>], iteration_bounds = array<i64: 2>, scalar_prefetch = 0 : i64, scratch_operands = 0 : i64, tpu.core_type = #tpu.core_type<tc>, window_params = [{transform_indices = @transform_0, window_bounds = array<i64: 1, 8, 128>}, {pipeline_mode = #tpu.pipeline_mode<synchronous>, transform_indices = @transform_1, window_bounds = array<i64: 128, 384>}, {pipeline_mode = #tpu.pipeline_mode<synchronous>, transform_indices = @transform_2, window_bounds = array<i64: 1, 384>}, {transform_indices = @transform_3, window_bounds = array<i64: 1, 8, 128>}]} {
    %c0 = arith.constant 0 : index
    %c0_0 = arith.constant 0 : index
    %c0_1 = arith.constant 0 : index
    %0 = vector.load %arg1[%c0, %c0_0, %c0_1] : memref<1x8x128xf32, #tpu.memory_space<vmem>>, vector<1x8x128xf32>
    %c0_2 = arith.constant 0 : index
    %c0_3 = arith.constant 0 : index
    %1 = vector.load %arg2[%c0_2, %c0_3] : memref<128x384xbf16, #tpu.memory_space<vmem>>, vector<128x384xbf16>
    %c0_4 = arith.constant 0 : index
    %c0_5 = arith.constant 0 : index
    %2 = vector.load %arg3[%c0_4, %c0_5] : memref<1x384xf32, #tpu.memory_space<vmem>>, vector<1x384xf32>
    %3 = vector.shape_cast %0 : vector<1x8x128xf32> to vector<8x128xf32>
    %4 = arith.truncf %3 : vector<8x128xf32> to vector<8x128xbf16>
    %cst = arith.constant dense<0.000000e+00> : vector<8x384xf32>
    %5 = tpu.matmul %4, %1, %cst {dimension_numbers = #tpu.dot_dimension_numbers<[1], [0], [0], [1], [0, 0, 1, 1], [], []>} : vector<8x128xbf16>, vector<128x384xbf16>, vector<8x384xf32> -> vector<8x384xf32>
    %6 = vector.broadcast %2 : vector<1x384xf32> to vector<8x384xf32>
    %7 = arith.addf %5, %6 : vector<8x384xf32>
    %8 = vector.shape_cast %7 : vector<8x384xf32> to vector<1x8x384xf32>
    %9 = arith.truncf %8 : vector<1x8x384xf32> to vector<1x8x384xbf16>
    %10 = vector.extract_strided_slice %9 {offsets = [0, 0, 0], sizes = [1, 8, 128], strides = [1, 1, 1]} : vector<1x8x384xbf16> to vector<1x8x128xbf16>
    %11 = vector.extract_strided_slice %9 {offsets = [0, 0, 128], sizes = [1, 8, 128], strides = [1, 1, 1]} : vector<1x8x384xbf16> to vector<1x8x128xbf16>
    %12 = vector.extract_strided_slice %9 {offsets = [0, 0, 256], sizes = [1, 8, 128], strides = [1, 1, 1]} : vector<1x8x384xbf16> to vector<1x8x128xbf16>
    "tpu.trace_start"() <{level = 10 : i32, message = "bqh,bkh->bqk"}> : () -> ()
    %cst_6 = arith.constant dense<0.000000e+00> : vector<1x8x8xf32>
    %13 = tpu.matmul %10, %11, %cst_6 {dimension_numbers = #tpu.dot_dimension_numbers<[2], [2], [1], [1], [0, 0, 0, 1, 1, 1], [0], [0]>} : vector<1x8x128xbf16>, vector<1x8x128xbf16>, vector<1x8x8xf32> -> vector<1x8x8xf32>
    "tpu.trace_stop"() : () -> ()
    %cst_7 = arith.constant dense<0xFF800000> : vector<1x8xf32>
    %14 = vector.multi_reduction <maximumf>, %13, %cst_7 [2] : vector<1x8x8xf32> to vector<1x8xf32>
    %15 = vector.shape_cast %14 : vector<1x8xf32> to vector<1x8x1xf32>
    %16 = vector.broadcast %15 : vector<1x8x1xf32> to vector<1x8x8xf32>
    %17 = arith.subf %13, %16 : vector<1x8x8xf32>
    %18 = math.exp %17 : vector<1x8x8xf32>
    %cst_8 = arith.constant dense<0.000000e+00> : vector<1x8xf32>
    %19 = vector.multi_reduction <add>, %18, %cst_8 [2] : vector<1x8x8xf32> to vector<1x8xf32>
    %20 = vector.shape_cast %19 : vector<1x8xf32> to vector<1x8x1xf32>
    %21 = tpu.reciprocal %20 {approx = true} : vector<1x8x1xf32> -> vector<1x8x1xf32>
    %22 = vector.broadcast %21 : vector<1x8x1xf32> to vector<1x8x8xf32>
    %23 = arith.mulf %18, %22 : vector<1x8x8xf32>
    %24 = arith.truncf %23 : vector<1x8x8xf32> to vector<1x8x8xbf16>
    "tpu.trace_start"() <{level = 10 : i32, message = "bqk,bkh->bqh"}> : () -> ()
    %cst_9 = arith.constant dense<0.000000e+00> : vector<1x8x128xf32>
    %25 = tpu.matmul %24, %12, %cst_9 {dimension_numbers = #tpu.dot_dimension_numbers<[2], [1], [1], [2], [0, 0, 0, 1, 1, 2], [0], [0]>} : vector<1x8x8xbf16>, vector<1x8x128xbf16>, vector<1x8x128xf32> -> vector<1x8x128xf32>
    "tpu.trace_stop"() : () -> ()
    %26 = arith.addf %25, %0 : vector<1x8x128xf32>
    %c0_10 = arith.constant 0 : index
    %c0_11 = arith.constant 0 : index
    %c0_12 = arith.constant 0 : index
    %27 = vector.load %arg4[%c0_10, %c0_11, %c0_12] : memref<1x8x128xf32, #tpu.memory_space<vmem>>, vector<1x8x128xf32>
    tpu.vector_store %arg4[%c0_10, %c0_11, %c0_12], %26 {strides = array<i32>} : memref<1x8x128xf32, #tpu.memory_space<vmem>>, vector<1x8x128xf32>,
    return
  }
  func.func @transform_0(%arg0: i32) -> (i32, i32, i32) {
    %c0_i32 = arith.constant 0 : i32
    %c0_i32_0 = arith.constant 0 : i32
    %c0_i32_1 = arith.constant 0 : i32
    return %arg0, %c0_i32, %c0_i32_0 : i32, i32, i32
  }
  func.func @transform_1(%arg0: i32) -> (i32, i32) {
    %c0_i32 = arith.constant 0 : i32
    %c0_i32_0 = arith.constant 0 : i32
    %c0_i32_1 = arith.constant 0 : i32
    return %c0_i32, %c0_i32_0 : i32, i32
  }
  func.func @transform_2(%arg0: i32) -> (i32, i32) {
    %c0_i32 = arith.constant 0 : i32
    %c0_i32_0 = arith.constant 0 : i32
    %c0_i32_1 = arith.constant 0 : i32
    return %c0_i32, %c0_i32_0 : i32, i32
  }
  func.func @transform_3(%arg0: i32) -> (i32, i32, i32) {
    %c0_i32 = arith.constant 0 : i32
    %c0_i32_0 = arith.constant 0 : i32
    %c0_i32_1 = arith.constant 0 : i32
    return %arg0, %c0_i32, %c0_i32_0 : i32, i32, i32
  }
}

</mosaic_0001>

<llo_original>
// kernel: tpu_custom_call.1
$region0: #{tpu_custom_call.1}
  #allocation0 [shape = 'u32[]', space=smem, size = 0x4, offset = 0x4, fixed_abs, tag = 'smem constant byte address 0x4 - core index']
  #allocation1 [shape = 'u32[144,128]{1,0:T(1,128)}', space=vmem, size = 0x12000, scoped, tag = 'internal scratch']
  %s0 = inlined_call_operand.hbm [shape: f32[2,8,128], index: 0, kind: input, shape index: {}]
  %s1 = inlined_call_operand.hbm [shape: bf16[128,384], index: 1, kind: input, shape index: {}]
  %s2 = inlined_call_operand.vmem [shape: f32[1,384], index: 2, kind: input, shape index: {}]
  %s3 = inlined_call_operand.hbm [shape: f32[2,8,128], index: 3, kind: output, shape index: {}]
  %s4 = sld [smem:[#allocation0]]
  $region53: #{tpu_custom_call.1} parent=0
    _
  %s6 = ssub.s32 1, %s4
  %s7 = scalar_select 0, %s6, %s4
  $region1: #{tpu_custom_call.1} parent=0
    #allocation2 [shape = 'u8[8192]{0}', space=vmem, size = 0x2000, scoped, tag = 'input window, operand 0']
    #allocation3 [shape = 's32[2]{0}', space=sflag, size = 0x8, scoped, tag = 'scoped memory for tpu_custom_call.1']
    #allocation4 [shape = 's32[2]{0}', space=sflag, size = 0x8, scoped, tag = 'scoped memory for tpu_custom_call.1']
    #allocation5 [shape = 'u8[98304]{0}', space=vmem, size = 0x18000, scoped, tag = 'input window, operand 1, single buffered']
    #allocation6 [shape = 's32[1]{0}', space=sflag, size = 0x4, scoped, tag = 'scoped memory for tpu_custom_call.1']
    #allocation7 [shape = 'u8[8192]{0}', space=vmem, size = 0x2000, scoped, tag = 'output window, operand 0']
    %8 = vsyncpa [#allocation3], 0
    %s9 = scalar_lea.sflag [#allocation3], 1
    %10 = vsyncpa %s9, 0
    %11 = vsyncpa [#allocation6], 0
    %12 = vsyncpa [#allocation4], 0
    %s13 = scalar_lea.sflag [#allocation4], 1
    %14 = vsyncpa %s13, 0
    loop: start=0, step=1, limit=4
    $region2: #{tpu_custom_call.1} parent=1 // loop_pre_header
      _
    $region3: #{tpu_custom_call.1} parent=1 // loop_header
      %s16 = sphi 0, %s20
      %p17 = scmp.ge.s32.totalorder %s16, 4
      %s26 = sphi 0, %s28
      %s29 = sphi 0, %s26
      %s30 = sphi 0, %s29
      %s46 = sphi 0, %s30
      %s50 = sphi 0, %s50
      %s52 = sphi 0, %s50
      %s53 = sphi 0, %s52
      %s67 = sphi 0, %s53
      %s71 = sphi 0, %s71
      %s73 = sphi 0, %s71
      %s74 = sphi 0, %s73
      %s88 = sphi 0, %s74
      %s94 = sphi 0, %s96
      %s97 = sphi 0, %s94
      %s98 = sphi 0, %s97
      %s114 = sphi 0, %s98
    $region4: #{tpu_custom_call.1} parent=1 // loop_header_branch
      %19 = sbr.rel (%p17) target = $region8
    $region5: #{tpu_custom_call.1} parent=1 // loop_body
      %s21 = ssub.s32 %s16, 1
      %s22 = ssub.s32 %s16, 2
      %s23 = sadd.s32 %s16, 1
      %s24 = ssub.s32 %s16, %s23
      %p25 = scmp.eq.s32.totalorder %s24, 0
      %s27 = sadd.s32 %s26, 1
      %s28 = scalar_select %p25, %s26, %s27
      %p31 = pneg %p25
      %p32 = scmp.eq.s32.totalorder %s16, 1
      %p33 = por %p31, %p32
      %p34 = scmp.ne.s32.totalorder %s26, %s29
      %p35 = scmp.eq.s32.totalorder %s16, 0
      %p36 = por %p34, %p35
      %p37 = scmp.ne.s32.totalorder %s26, %s29
      %p38 = scmp.eq.s32.totalorder %s21, 1
      %p39 = por %p37, %p38
      %p40 = scmp.ne.s32.totalorder %s29, %s30
      %p41 = scmp.eq.s32.totalorder %s21, 0
      %p42 = por %p40, %p41
      %p43 = scmp.ne.s32.totalorder %s29, %s30
      %p44 = scmp.eq.s32.totalorder %s22, 1
      %p45 = por %p43, %p44
      %p47 = scmp.ne.s32.totalorder %s30, %s46
      %p48 = scmp.eq.s32.totalorder %s22, 0
      %p49 = por %p47, %p48
      %s51 = sadd.s32 %s50, 1
      %p54 = scmp.eq.s32.totalorder %s16, 1
      %p55 = scmp.ne.s32.totalorder %s50, %s52
      %p56 = scmp.eq.s32.totalorder %s16, 0
      %p57 = por %p55, %p56
      %p58 = scmp.ne.s32.totalorder %s50, %s52
      %p59 = scmp.eq.s32.totalorder %s21, 1
      %p60 = por %p58, %p59
      %p61 = scmp.ne.s32.totalorder %s52, %s53
      %p62 = scmp.eq.s32.totalorder %s21, 0
      %p63 = por %p61, %p62
      %p64 = scmp.ne.s32.totalorder %s52, %s53
      %p65 = scmp.eq.s32.totalorder %s22, 1
      %p66 = por %p64, %p65
      %p68 = scmp.ne.s32.totalorder %s53, %s67
      %p69 = scmp.eq.s32.totalorder %s22, 0
      %p70 = por %p68, %p69
      %s72 = sadd.s32 %s71, 1
      %p75 = scmp.eq.s32.totalorder %s16, 1
      %p76 = scmp.ne.s32.totalorder %s71, %s73
      %p77 = scmp.eq.s32.totalorder %s16, 0
      %p78 = por %p76, %p77
      %p79 = scmp.ne.s32.totalorder %s71, %s73
      %p80 = scmp.eq.s32.totalorder %s21, 1
      %p81 = por %p79, %p80
      %p82 = scmp.ne.s32.totalorder %s73, %s74
      %p83 = scmp.eq.s32.totalorder %s21, 0
      %p84 = por %p82, %p83
      %p85 = scmp.ne.s32.totalorder %s73, %s74
      %p86 = scmp.eq.s32.totalorder %s22, 1
      %p87 = por %p85, %p86
      %p89 = scmp.ne.s32.totalorder %s74, %s88
      %p90 = scmp.eq.s32.totalorder %s22, 0
      %p91 = por %p89, %p90
      %s92 = ssub.s32 %s16, %s23
      %p93 = scmp.eq.s32.totalorder %s92, 0
      %s95 = sadd.s32 %s94, 1
      %s96 = scalar_select %p93, %s94, %s95
      %p99 = pneg %p93
      %p100 = scmp.eq.s32.totalorder %s16, 1
      %p101 = por %p99, %p100
      %p102 = scmp.ne.s32.totalorder %s94, %s97
      %p103 = scmp.eq.s32.totalorder %s16, 0
      %p104 = por %p102, %p103
      %p105 = scmp.ne.s32.totalorder %s94, %s97
      %p106 = scmp.eq.s32.totalorder %s21, 1
      %p107 = por %p105, %p106
      %p108 = scmp.ne.s32.totalorder %s97, %s98
      %p109 = scmp.eq.s32.totalorder %s21, 0
      %p110 = por %p108, %p109
      %p111 = scmp.ne.s32.totalorder %s97, %s98
      %p112 = scmp.eq.s32.totalorder %s22, 1
      %p113 = por %p111, %p112
      %p115 = scmp.ne.s32.totalorder %s98, %s114
      %p116 = scmp.eq.s32.totalorder %s22, 0
      %p117 = por %p115, %p116
      %p118 = scmp.le.s32.totalorder 1, %s16
      %p119 = scmp.lt.s32.totalorder %s16, 3
      %p120 = pnand %p118, %p119
      %p121 = pneg %p120
      // Predicated region
      $region9: #{tpu_custom_call.1} parent=5 // pred_check
        _
      $region10: #{tpu_custom_call.1} parent=5 // pred_check_branch
        %123 = sbr.rel (%p120) target = $region12
      $region11: #{tpu_custom_call.1} parent=5 // pred_region
        %s124 = ssub.s32 %s16, 1
        // Predicated region
        $region13: #{tpu_custom_call.1} parent=11 // pred_check
          %p125 = pneg %p63
        $region14: #{tpu_custom_call.1} parent=11 // pred_check_branch
          %127 = sbr.rel (%p125) target = $region16
        $region15: #{tpu_custom_call.1} parent=11 // pred_region
          %s129 = ssub.s32 3072, 3072
          %130 = vsyncadd [#allocation6], %s129
          %s131 = sshll.u32 [#allocation5], 4
          %s132 = int_to_ptr.vmem [resolvable:$true] %s131
          %137 = dma.hbm_to_vmem [thread:$0]  %s1, 3072, %s132, [#allocation6], 192, 192, 12
        $region16: #{tpu_custom_call.1} parent=11 // pred_fallthru
          _
        // Predicated region
        $region17: #{tpu_custom_call.1} parent=11 // pred_check
          %p138 = pneg %p84
        $region18: #{tpu_custom_call.1} parent=11 // pred_check_branch
          %140 = sbr.rel (%p138) target = $region20
        $region19: #{tpu_custom_call.1} parent=11 // pred_region
          _
        $region20: #{tpu_custom_call.1} parent=11 // pred_fallthru
          _
      $region12: #{tpu_custom_call.1} parent=5 // pred_fallthru
        _
      %p141 = scmp.lt.s32.totalorder %s16, 2
      // Predicated region
      $region21: #{tpu_custom_call.1} parent=5 // pred_check
        %p142 = pneg %p141
      $region22: #{tpu_custom_call.1} parent=5 // pred_check_branch
        %144 = sbr.rel (%p142) target = $region24
      $region23: #{tpu_custom_call.1} parent=5 // pred_region
        // Predicated region
        $region25: #{tpu_custom_call.1} parent=23 // pred_check
          %p145 = pneg %p36
        $region26: #{tpu_custom_call.1} parent=23 // pred_check_branch
          %147 = sbr.rel (%p145) target = $region28
        $region27: #{tpu_custom_call.1} parent=23 // pred_region
          %s148 = sand.u32 %s26, 1
          %s149 = scalar_lea.sflag [#allocation3], %s148
          %s150 = sand.u32 %s26, 1
          %s151 = smul.addr %s150, 8
          %s152 = scalar_lea.vmem [#allocation2], %s151
          %s154 = ssub.s32 128, 128
          %155 = vsyncadd %s149, %s154
          %s156 = smul.addr %s16, 128
          %s157 = scalar_lea.hbm %s0, %s156
          %s159 = sshll.u32 %s152, 4
          %s160 = int_to_ptr.vmem [resolvable:$true] %s159
          %162 = dma.hbm_to_vmem [thread:$0]  %s157, 128, %s160, %s149
        $region28: #{tpu_custom_call.1} parent=23 // pred_fallthru
          _
      $region24: #{tpu_custom_call.1} parent=5 // pred_fallthru
        _
      %p163 = scmp.le.s32.totalorder 1, %s16
      %p164 = scmp.lt.s32.totalorder %s16, 3
      %p165 = pnand %p163, %p164
      %p166 = pneg %p165
      // Predicated region
      $region29: #{tpu_custom_call.1} parent=5 // pred_check
        _
      $region30: #{tpu_custom_call.1} parent=5 // pred_check_branch
        %168 = sbr.rel (%p165) target = $region32
      $region31: #{tpu_custom_call.1} parent=5 // pred_region
        %s169 = ssub.s32 %s16, 1
        %s170 = sand.u32 %s29, 1
        %s171 = scalar_lea.sflag [#allocation3], %s170
        %s172 = sand.u32 %s29, 1
        %s173 = smul.addr %s172, 8
        %s174 = scalar_lea.vmem [#allocation2], %s173
        // Predicated region
        $region33: #{tpu_custom_call.1} parent=31 // pred_check
          %p175 = pneg %p42
        $region34: #{tpu_custom_call.1} parent=31 // pred_check_branch
          %177 = sbr.rel (%p175) target = $region36
        $region35: #{tpu_custom_call.1} parent=31 // pred_region
          %178 = dma.done %s171, 128
        $region36: #{tpu_custom_call.1} parent=31 // pred_fallthru
          _
        // Predicated region
        $region37: #{tpu_custom_call.1} parent=31 // pred_check
          %p179 = pneg %p63
        $region38: #{tpu_custom_call.1} parent=31 // pred_check_branch
          %181 = sbr.rel (%p179) target = $region40
        $region39: #{tpu_custom_call.1} parent=31 // pred_region
          %182 = dma.done [#allocation6], 3072
        $region40: #{tpu_custom_call.1} parent=31 // pred_fallthru
          _
        %s183 = sand.u32 %s29, 1
        %s184 = scalar_lea.sflag [#allocation3], %s183
        %s185 = sand.u32 %s29, 1
        %s186 = smul.addr %s185, 8
        %s187 = scalar_lea.vmem [#allocation2], %s186
        %p188 = pneg %p42
        %p189 = pneg %p39
        %p190 = pneg %p63
        %p191 = pneg %p60
        %p192 = pneg %p84
        %p193 = pneg %p81
        %p194 = pneg %p110
        %p195 = pneg %p107
        %s196 = sand.u32 %s97, 1
        %s197 = scalar_lea.sflag [#allocation4], %s196
        %s198 = sand.u32 %s97, 1
        %s199 = smul.addr %s198, 8
        %s200 = scalar_lea.vmem [#allocation7], %s199
        %v202 = vld [vmem:[%s174] sm:$0xff]
        %v203 = vld [vmem:[#allocation5] sm:$0xff]
        %v204 = vld [vmem:[#allocation5 + $0x8] sm:$0xf]
        %v205 = vld [vmem:[#allocation5 + $0xc] sm:$0xff]
        %v206 = vld [vmem:[#allocation5 + $0x14] sm:$0xf]
        %v207 = vld [vmem:[#allocation5 + $0x18] sm:$0xff]
        %v208 = vld [vmem:[#allocation5 + $0x20] sm:$0xf]
        %v209 = vld [vmem:[#allocation5 + $0x24] sm:$0xff]
        %v210 = vld [vmem:[#allocation5 + $0x2c] sm:$0xf]
        %v211 = vld [vmem:[#allocation5 + $0x30] sm:$0xff]
        %v212 = vld [vmem:[#allocation5 + $0x38] sm:$0xf]
        %v213 = vld [vmem:[#allocation5 + $0x3c] sm:$0xff]
        %v214 = vld [vmem:[#allocation5 + $0x44] sm:$0xf]
        %v215 = vld [vmem:[#allocation5 + $0x48] sm:$0xff]
        %v216 = vld [vmem:[#allocation5 + $0x50] sm:$0xf]
        %v217 = vld [vmem:[#allocation5 + $0x54] sm:$0xff]
        %v218 = vld [vmem:[#allocation5 + $0x5c] sm:$0xf]
        %v219 = vld [vmem:[#allocation5 + $0x60] sm:$0xff]
        %v220 = vld [vmem:[#allocation5 + $0x68] sm:$0xf]
        %v221 = vld [vmem:[#allocation5 + $0x6c] sm:$0xff]
        %v222 = vld [vmem:[#allocation5 + $0x74] sm:$0xf]
        %v223 = vld [vmem:[#allocation5 + $0x78] sm:$0xff]
        %v224 = vld [vmem:[#allocation5 + $0x80] sm:$0xf]
        %v225 = vld [vmem:[#allocation5 + $0x84] sm:$0xff]
        %v226 = vld [vmem:[#allocation5 + $0x8c] sm:$0xf]
        %v227 = vld [vmem:[#allocation5 + $0x90] sm:$0xff]
        %v228 = vld [vmem:[#allocation5 + $0x98] sm:$0xf]
        %v229 = vld [vmem:[#allocation5 + $0x9c] sm:$0xff]
        %v230 = vld [vmem:[#allocation5 + $0xa4] sm:$0xf]
        %v231 = vld [vmem:[#allocation5 + $0xa8] sm:$0xff]
        %v232 = vld [vmem:[#allocation5 + $0xb0] sm:$0xf]
        %v233 = vld [vmem:[#allocation5 + $0xb4] sm:$0xff]
        %v234 = vld [vmem:[#allocation5 + $0xbc] sm:$0xf]
        %v235 = vld [vmem:[%s2] sm:$0x7]
        %v236 = vpack.c.bf16 %v202, %v202
        %v238 = vlaneseq
        %v239 = vshrl.u32 %v238, 7
        %v240 = vsub.s32 0, %v239
        %v241 = vrot.slane %v235, %v240
        %v242 = vlaneseq
        %v243 = vshrl.u32 %v242, 7
        %v244 = vsub.s32 1, %v243
        %v245 = vrot.slane %v235, %v244
        %v246 = vlaneseq
        %v247 = vshrl.u32 %v246, 7
        %v248 = vsub.s32 2, %v247
        %v249 = vrot.slane %v235, %v248
        %v285 = vunpack.c.l.b16 %v203
        %v286 = vunpack.c.h.b16 %v203
        %v287 = vunpack.c.l.b16 %v204
        %v288 = vunpack.c.l.b16 %v205
        %v289 = vunpack.c.h.b16 %v205
        %v290 = vunpack.c.l.b16 %v206
        %v291 = vunpack.c.l.b16 %v207
        %v292 = vunpack.c.h.b16 %v207
        %v293 = vunpack.c.l.b16 %v208
        %v294 = vunpack.c.l.b16 %v209
        %v295 = vunpack.c.h.b16 %v209
        %v296 = vunpack.c.l.b16 %v210
        %v297 = vunpack.c.l.b16 %v211
        %v298 = vunpack.c.h.b16 %v211
        %v299 = vunpack.c.l.b16 %v212
        %v300 = vunpack.c.l.b16 %v213
        %v301 = vunpack.c.h.b16 %v213
        %v302 = vunpack.c.l.b16 %v214
        %v303 = vunpack.c.l.b16 %v215
        %v304 = vunpack.c.h.b16 %v215
        %v305 = vunpack.c.l.b16 %v216
        %v306 = vunpack.c.l.b16 %v217
        %v307 = vunpack.c.h.b16 %v217
        %v308 = vunpack.c.l.b16 %v218
        %v309 = vunpack.c.l.b16 %v219
        %v310 = vunpack.c.h.b16 %v219
        %v311 = vunpack.c.l.b16 %v220
        %v312 = vunpack.c.l.b16 %v221
        %v313 = vunpack.c.h.b16 %v221
        %v314 = vunpack.c.l.b16 %v222
        %v315 = vunpack.c.l.b16 %v223
        %v316 = vunpack.c.h.b16 %v223
        %v317 = vunpack.c.l.b16 %v224
        %v318 = vunpack.c.l.b16 %v225
        %v319 = vunpack.c.h.b16 %v225
        %v320 = vunpack.c.l.b16 %v226
        %v321 = vunpack.c.l.b16 %v227
        %v322 = vunpack.c.h.b16 %v227
        %v323 = vunpack.c.l.b16 %v228
        %v324 = vunpack.c.l.b16 %v229
        %v325 = vunpack.c.h.b16 %v229
        %v326 = vunpack.c.l.b16 %v230
        %v327 = vunpack.c.l.b16 %v231
        %v328 = vunpack.c.h.b16 %v231
        %v329 = vunpack.c.l.b16 %v232
        %v330 = vunpack.c.l.b16 %v233
        %v331 = vunpack.c.h.b16 %v233
        %v332 = vunpack.c.l.b16 %v234
        %v333 = vpack.c.b16 %v288, %v285
        %v334 = vpack.c.b16 %v289, %v286
        %v335 = vpack.c.b16 %v290, %v287
        %v336 = vpack.c.b16 %v294, %v291
        %v337 = vpack.c.b16 %v295, %v292
        %v338 = vpack.c.b16 %v296, %v293
        %v339 = vpack.c.b16 %v300, %v297
        %v340 = vpack.c.b16 %v301, %v298
        %v341 = vpack.c.b16 %v302, %v299
        %v342 = vpack.c.b16 %v306, %v303
        %v343 = vpack.c.b16 %v307, %v304
        %v344 = vpack.c.b16 %v308, %v305
        %v345 = vpack.c.b16 %v312, %v309
        %v346 = vpack.c.b16 %v313, %v310
        %v347 = vpack.c.b16 %v314, %v311
        %v348 = vpack.c.b16 %v318, %v315
        %v349 = vpack.c.b16 %v319, %v316
        %v350 = vpack.c.b16 %v320, %v317
        %v351 = vpack.c.b16 %v324, %v321
        %v352 = vpack.c.b16 %v325, %v322
        %v353 = vpack.c.b16 %v326, %v323
        %v354 = vpack.c.b16 %v330, %v327
        %v355 = vpack.c.b16 %v331, %v328
        %v356 = vpack.c.b16 %v332, %v329
        %381 = vmatprep.subr.bf16.mxu0 %v334
        %382 = vmatpush1.bf16.msra.mxu0 %v333
        %383 = vmatprep.subr.bf16.mxu0 %v337
        %384 = vmatpush1.bf16.msra.mxu0 %v336
        %385 = vmatprep.subr.bf16.mxu0 %v340
        %386 = vmatpush1.bf16.msra.mxu0 %v339
        %387 = vmatprep.subr.bf16.mxu0 %v343
        %388 = vmatpush1.bf16.msra.mxu0 %v342
        %389 = vmatprep.subr.bf16.mxu0 %v346
        %390 = vmatpush1.bf16.msra.mxu0 %v345
        %391 = vmatprep.subr.bf16.mxu0 %v349
        %392 = vmatpush1.bf16.msra.mxu0 %v348
        %393 = vmatprep.subr.bf16.mxu0 %v352
        %394 = vmatpush1.bf16.msra.mxu0 %v351
        %395 = vmatprep.subr.bf16.mxu0 %v355
        %396 = vmatpush1.bf16.msra.mxu0 %v354
        %397 = vmatprep.subr.bf16.mxu0 0
        %398 = vmatpush1.bf16.msra.mxu0 0
        %399 = vmatprep.subr.bf16.mxu0 0
        %400 = vmatpush1.bf16.msra.mxu0 0
        %401 = vmatprep.subr.bf16.mxu0 0
        %402 = vmatpush1.bf16.msra.mxu0 0
        %403 = vmatprep.subr.bf16.mxu0 0
        %404 = vmatpush1.bf16.msra.mxu0 0
        %405 = vmatprep.subr.bf16.mxu0 0
        %406 = vmatpush1.bf16.msra.mxu0 0
        %407 = vmatprep.subr.bf16.mxu0 0
        %408 = vmatpush1.bf16.msra.mxu0 0
        %409 = vmatprep.subr.bf16.mxu0 0
        %410 = vmatpush1.bf16.msra.mxu0 0
        %411 = vmatprep.subr.bf16.mxu0 0
        %412 = vmatpush1.bf16.msra.mxu0 0
        %413 = vmatprep.mubr.bf16.mxu0 0
        %414 = vmatmul.mubr.bf16.gmra.mrb[0].mxu0 %v236
        %v415 = vpop.f32.mrb[0].mxu0
        %v416 = vadd.f32 %v241, %v415
        %v417 = vpop.f32.mrb[0].mxu0
        %v418 = vadd.f32 %v245, %v417
        %v419 = vpop.f32.mrb[0].mxu0
        %v420 = vpop.f32.mrb[0].mxu0
        %421 = vdwg.mxu0
        %422 = vmatprep.subr.bf16.mxu0 0
        %423 = vmatpush1.bf16.msra.mxu0 %v335
        %424 = vmatprep.subr.bf16.mxu0 0
        %425 = vmatpush1.bf16.msra.mxu0 %v338
        %426 = vmatprep.subr.bf16.mxu0 0
        %427 = vmatpush1.bf16.msra.mxu0 %v341
        %428 = vmatprep.subr.bf16.mxu0 0
        %429 = vmatpush1.bf16.msra.mxu0 %v344
        %430 = vmatprep.subr.bf16.mxu0 0
        %431 = vmatpush1.bf16.msra.mxu0 %v347
        %432 = vmatprep.subr.bf16.mxu0 0
        %433 = vmatpush1.bf16.msra.mxu0 %v350
        %434 = vmatprep.subr.bf16.mxu0 0
        %435 = vmatpush1.bf16.msra.mxu0 %v353
        %436 = vmatprep.subr.bf16.mxu0 0
        %437 = vmatpush1.bf16.msra.mxu0 %v356
        %438 = vmatprep.subr.bf16.mxu0 0
        %439 = vmatpush1.bf16.msra.mxu0 0
        %440 = vmatprep.subr.bf16.mxu0 0
        %441 = vmatpush1.bf16.msra.mxu0 0
        %442 = vmatprep.subr.bf16.mxu0 0
        %443 = vmatpush1.bf16.msra.mxu0 0
        %444 = vmatprep.subr.bf16.mxu0 0
        %445 = vmatpush1.bf16.msra.mxu0 0
        %446 = vmatprep.subr.bf16.mxu0 0
        %447 = vmatpush1.bf16.msra.mxu0 0
        %448 = vmatprep.subr.bf16.mxu0 0
        %449 = vmatpush1.bf16.msra.mxu0 0
        %450 = vmatprep.subr.bf16.mxu0 0
        %451 = vmatpush1.bf16.msra.mxu0 0
        %452 = vmatprep.subr.bf16.mxu0 0
        %453 = vmatpush1.bf16.msra.mxu0 0
        %454 = vmatprep.mubr.bf16.mxu0 0
        %455 = vmatmul.mubr.bf16.gmra.mrb[0].mxu0 %v236
        %v456 = vpop.f32.mrb[0].mxu0
        %v457 = vadd.f32 %v249, %v456
        %v458 = vpop.f32.mrb[0].mxu0
        %v459 = vpop.f32.mrb[0].mxu0
        %v460 = vpop.f32.mrb[0].mxu0
        %461 = vdwg.mxu0
        %v462 = vpack.c.bf16 %v416, %v416
        %v463 = vpack.c.bf16 %v418, %v418
        %v464 = vpack.c.bf16 %v457, %v457
        %465 = vmatprep.subr.bf16.mxu0 0
        %466 = vmatpush1.bf16.xpose.msra.mxu0 %v463
        %467 = vmatprep.subr.bf16.mxu0 0
        %468 = vmatpush1.bf16.xpose.msra.mxu0 0
        %469 = vmatprep.subr.bf16.mxu0 0
        %470 = vmatpush1.bf16.xpose.msra.mxu0 0
        %471 = vmatprep.subr.bf16.mxu0 0
        %472 = vmatpush1.bf16.xpose.msra.mxu0 0
        %473 = vmatprep.subr.bf16.mxu0 0
        %474 = vmatpush1.bf16.xpose.msra.mxu0 0
        %475 = vmatprep.subr.bf16.mxu0 0
        %476 = vmatpush1.bf16.xpose.msra.mxu0 0
        %477 = vmatprep.subr.bf16.mxu0 0
        %478 = vmatpush1.bf16.xpose.msra.mxu0 0
        %479 = vmatprep.subr.bf16.mxu0 0
        %480 = vmatpush1.bf16.xpose.msra.mxu0 0
        %481 = vmatprep.subr.bf16.mxu0 0
        %482 = vmatpush1.bf16.xpose.msra.mxu0 0
        %483 = vmatprep.subr.bf16.mxu0 0
        %484 = vmatpush1.bf16.xpose.msra.mxu0 0
        %485 = vmatprep.subr.bf16.mxu0 0
        %486 = vmatpush1.bf16.xpose.msra.mxu0 0
        %487 = vmatprep.subr.bf16.mxu0 0
        %488 = vmatpush1.bf16.xpose.msra.mxu0 0
        %489 = vmatprep.subr.bf16.mxu0 0
        %490 = vmatpush1.bf16.xpose.msra.mxu0 0
        %491 = vmatprep.subr.bf16.mxu0 0
        %492 = vmatpush1.bf16.xpose.msra.mxu0 0
        %493 = vmatprep.subr.bf16.mxu0 0
        %494 = vmatpush1.bf16.xpose.msra.mxu0 0
        %495 = vmatprep.subr.bf16.mxu0 0
        %496 = vmatpush1.bf16.xpose.msra.mxu0 0
        %497 = vmatprep.mubr.bf16.mxu0 0
        %498 = vmatmul.mubr.bf16.gmra.mrb[0].mxu0 %v462
        %v499 = vpop.f32.mrb[0].mxu0
        %v500 = vadd.f32 0.0, %v499
        %v501 = vpop.f32.mrb[0].mxu0
        %v502 = vpop.f32.mrb[0].mxu0
        %v503 = vpop.f32.mrb[0].mxu0
        %504 = vdwg.mxu0
        %vm505 = vcmask 64512
        %v506 = vsel %vm505, %v500, -inf
        %507 = vmax.xlane.f32.xlu0 %v506
        %v508 = vpop.xlane.xlu0 %507
        %v509 = vsub.f32 %v500, %v508
        %v510 = vmul.f32 %v509, 1.442695
        %v511 = vpow.pop %v510
        %v512 = vsel %vm505, %v511, 0.0
        %513 = vadd.xlane.f32.xlu0 %v512
        %v514 = vpop.xlane.xlu0 %513
        %v515 = vrcp.pop %v514
        %v516 = vmul.f32 %v511, %v515
        %v517 = vpack.c.bf16 %v516, %v516
        %v519 = vsel %vm505, %v517, 0
        %vm521 = vcmask 1043456
        %v523 = vsel %vm521, %v464, 0
        %525 = vmatprep.subr.bf16.mxu0 0
        %526 = vmatpush1.bf16.msra.mxu0 %v523
        %527 = vmatprep.subr.bf16.mxu0 0
        %528 = vmatpush1.bf16.msra.mxu0 0
        %529 = vmatprep.subr.bf16.mxu0 0
        %530 = vmatpush1.bf16.msra.mxu0 0
        %531 = vmatprep.subr.bf16.mxu0 0
        %532 = vmatpush1.bf16.msra.mxu0 0
        %533 = vmatprep.subr.bf16.mxu0 0
        %534 = vmatpush1.bf16.msra.mxu0 0
        %535 = vmatprep.subr.bf16.mxu0 0
        %536 = vmatpush1.bf16.msra.mxu0 0
        %537 = vmatprep.subr.bf16.mxu0 0
        %538 = vmatpush1.bf16.msra.mxu0 0
        %539 = vmatprep.subr.bf16.mxu0 0
        %540 = vmatpush1.bf16.msra.mxu0 0
        %541 = vmatprep.subr.bf16.mxu0 0
        %542 = vmatpush1.bf16.msra.mxu0 0
        %543 = vmatprep.subr.bf16.mxu0 0
        %544 = vmatpush1.bf16.msra.mxu0 0
        %545 = vmatprep.subr.bf16.mxu0 0
        %546 = vmatpush1.bf16.msra.mxu0 0
        %547 = vmatprep.subr.bf16.mxu0 0
        %548 = vmatpush1.bf16.msra.mxu0 0
        %549 = vmatprep.subr.bf16.mxu0 0
        %550 = vmatpush1.bf16.msra.mxu0 0
        %551 = vmatprep.subr.bf16.mxu0 0
        %552 = vmatpush1.bf16.msra.mxu0 0
        %553 = vmatprep.subr.bf16.mxu0 0
        %554 = vmatpush1.bf16.msra.mxu0 0
        %555 = vmatprep.subr.bf16.mxu0 0
        %556 = vmatpush1.bf16.msra.mxu0 0
        %557 = vmatprep.mubr.bf16.mxu0 0
        %558 = vmatmul.mubr.bf16.gmra.mrb[0].mxu0 %v519
        %v559 = vpop.f32.mrb[0].mxu0
        %v560 = vadd.f32 %v202, %v559
        %v561 = vpop.f32.mrb[0].mxu0
        %v562 = vpop.f32.mrb[0].mxu0
        %v563 = vpop.f32.mrb[0].mxu0
        %564 = vdwg.mxu0
        %565 = vst [vmem:[%s200] sm:$0xff] %v560
        %s566 = sand.u32 %s97, 1
        %s567 = scalar_lea.sflag [#allocation4], %s566
        %s568 = sand.u32 %s97, 1
        %s569 = smul.addr %s568, 8
        %s570 = scalar_lea.vmem [#allocation7], %s569
        // Predicated region
        $region41: #{tpu_custom_call.1} parent=31 // pred_check
          %p571 = pneg %p107
        $region42: #{tpu_custom_call.1} parent=31 // pred_check_branch
          %573 = sbr.rel (%p571) target = $region44
        $region43: #{tpu_custom_call.1} parent=31 // pred_region
          %s575 = ssub.s32 128, 128
          %576 = vsyncadd %s567, %s575
          %s577 = smul.addr %s21, 128
          %s578 = scalar_lea.hbm %s3, %s577
          %s580 = sshll.u32 %s570, 4
          %s581 = int_to_ptr.vmem [resolvable:$true] %s580
          %583 = dma.vmem_to_hbm [thread:$0]  %s581, 128, %s578, %s567
        $region44: #{tpu_custom_call.1} parent=31 // pred_fallthru
          _
      $region32: #{tpu_custom_call.1} parent=5 // pred_fallthru
        _
      %p584 = scmp.le.s32.totalorder 2, %s16
      // Predicated region
      $region45: #{tpu_custom_call.1} parent=5 // pred_check
        %p585 = pneg %p584
      $region46: #{tpu_custom_call.1} parent=5 // pred_check_branch
        %587 = sbr.rel (%p585) target = $region48
      $region47: #{tpu_custom_call.1} parent=5 // pred_region
        %s588 = ssub.s32 %s16, 2
        // Predicated region
        $region49: #{tpu_custom_call.1} parent=47 // pred_check
          %p589 = pneg %p113
        $region50: #{tpu_custom_call.1} parent=47 // pred_check_branch
          %591 = sbr.rel (%p589) target = $region52
        $region51: #{tpu_custom_call.1} parent=47 // pred_region
          %s592 = sand.u32 %s98, 1
          %s593 = scalar_lea.sflag [#allocation4], %s592
          %s594 = sand.u32 %s98, 1
          %s595 = smul.addr %s594, 8
          %s596 = scalar_lea.vmem [#allocation7], %s595
          %597 = dma.done %s593, 128
        $region52: #{tpu_custom_call.1} parent=47 // pred_fallthru
          _
      $region48: #{tpu_custom_call.1} parent=5 // pred_fallthru
        _
    $region6: #{tpu_custom_call.1} parent=1 // loop_footer
      %s20 = sadd.s32 1, %s16
    $region7: #{tpu_custom_call.1} parent=1 // loop_footer_branch
      %15 = sbr.rel target = $region3
    $region8: #{tpu_custom_call.1} parent=1 // loop_exit
      _
    %598 = vsyncpa [#allocation3], 1
    %s599 = scalar_lea.sflag [#allocation3], 1
    %600 = vsyncpa %s599, 1
    %601 = vsyncpa [#allocation6], 1
    %602 = vsyncpa [#allocation4], 1
    %s603 = scalar_lea.sflag [#allocation4], 1
    %604 = vsyncpa %s603, 1

// kernel: tpu_custom_call.1
$region0: #{tpu_custom_call.1}
  #allocation0 [shape = 'u32[]', space=smem, size = 0x4, offset = 0x4, fixed_abs, tag = 'smem constant byte address 0x4 - core index']
  #allocation1 [shape = 'u32[144,128]{1,0:T(1,128)}', space=vmem, size = 0x12000, scoped, tag = 'internal scratch']
  %s0 = inlined_call_operand.hbm [shape: f32[2,8,128], index: 0, kind: input, shape index: {}]
  %s1 = inlined_call_operand.hbm [shape: bf16[128,384], index: 1, kind: input, shape index: {}]
  %s2 = inlined_call_operand.vmem [shape: f32[1,384], index: 2, kind: input, shape index: {}]
  %s3 = inlined_call_operand.hbm [shape: f32[2,8,128], index: 3, kind: output, shape index: {}]
  %s4 = sld [smem:[#allocation0]]
  $region53: #{tpu_custom_call.1} parent=0
    _
  %s6 = ssub.s32 1, %s4
  %s7 = scalar_select 0, %s6, %s4
  $region1: #{tpu_custom_call.1} parent=0
    #allocation2 [shape = 'u8[8192]{0}', space=vmem, size = 0x2000, scoped, tag = 'input window, operand 0']
    #allocation3 [shape = 's32[2]{0}', space=sflag, size = 0x8, scoped, tag = 'scoped memory for tpu_custom_call.1']
    #allocation4 [shape = 's32[2]{0}', space=sflag, size = 0x8, scoped, tag = 'scoped memory for tpu_custom_call.1']
    #allocation5 [shape = 'u8[98304]{0}', space=vmem, size = 0x18000, scoped, tag = 'input window, operand 1, single buffered']
    #allocation6 [shape = 's32[1]{0}', space=sflag, size = 0x4, scoped, tag = 'scoped memory for tpu_custom_call.1']
    #allocation7 [shape = 'u8[8192]{0}', space=vmem, size = 0x2000, scoped, tag = 'output window, operand 0']
    %8 = vsyncpa [#allocation3], 0
    %s9 = scalar_lea.sflag [#allocation3], 1
    %10 = vsyncpa %s9, 0
    %11 = vsyncpa [#allocation6], 0
    %12 = vsyncpa [#allocation4], 0
    %s13 = scalar_lea.sflag [#allocation4], 1
    %14 = vsyncpa %s13, 0
    loop: start=0, step=1, limit=4
    $region2: #{tpu_custom_call.1} parent=1 // loop_pre_header
      _
    $region3: #{tpu_custom_call.1} parent=1 // loop_header
      %s16 = sphi 0, %s20
      %p17 = scmp.ge.s32.totalorder %s16, 4
      %s26 = sphi 0, %s28
      %s29 = sphi 0, %s26
      %s30 = sphi 0, %s29
      %s46 = sphi 0, %s30
      %s50 = sphi 0, %s50
      %s52 = sphi 0, %s50
      %s53 = sphi 0, %s52
      %s67 = sphi 0, %s53
      %s71 = sphi 0, %s71
      %s73 = sphi 0, %s71
      %s74 = sphi 0, %s73
      %s88 = sphi 0, %s74
      %s94 = sphi 0, %s96
      %s97 = sphi 0, %s94
      %s98 = sphi 0, %s97
      %s114 = sphi 0, %s98
    $region4: #{tpu_custom_call.1} parent=1 // loop_header_branch
      %19 = sbr.rel (%p17) target = $region8
    $region5: #{tpu_custom_call.1} parent=1 // loop_body
      %s21 = ssub.s32 %s16, 1
      %s22 = ssub.s32 %s16, 2
      %s23 = sadd.s32 %s16, 1
      %s24 = ssub.s32 %s16, %s23
      %p25 = scmp.eq.s32.totalorder %s24, 0
      %s27 = sadd.s32 %s26, 1
      %s28 = scalar_select %p25, %s26, %s27
      %p31 = pneg %p25
      %p32 = scmp.eq.s32.totalorder %s16, 1
      %p33 = por %p31, %p32
      %p34 = scmp.ne.s32.totalorder %s26, %s29
      %p35 = scmp.eq.s32.totalorder %s16, 0
      %p36 = por %p34, %p35
      %p37 = scmp.ne.s32.totalorder %s26, %s29
      %p38 = scmp.eq.s32.totalorder %s21, 1
      %p39 = por %p37, %p38
      %p40 = scmp.ne.s32.totalorder %s29, %s30
      %p41 = scmp.eq.s32.totalorder %s21, 0
      %p42 = por %p40, %p41
      %p43 = scmp.ne.s32.totalorder %s29, %s30
      %p44 = scmp.eq.s32.totalorder %s22, 1
      %p45 = por %p43, %p44
      %p47 = scmp.ne.s32.totalorder %s30, %s46
      %p48 = scmp.eq.s32.totalorder %s22, 0
      %p49 = por %p47, %p48
      %s51 = sadd.s32 %s50, 1
      %p54 = scmp.eq.s32.totalorder %s16, 1
      %p55 = scmp.ne.s32.totalorder %s50, %s52
      %p56 = scmp.eq.s32.totalorder %s16, 0
      %p57 = por %p55, %p56
      %p58 = scmp.ne.s32.totalorder %s50, %s52
      %p59 = scmp.eq.s32.totalorder %s21, 1
      %p60 = por %p58, %p59
      %p61 = scmp.ne.s32.totalorder %s52, %s53
      %p62 = scmp.eq.s32.totalorder %s21, 0
      %p63 = por %p61, %p62
      %p64 = scmp.ne.s32.totalorder %s52, %s53
      %p65 = scmp.eq.s32.totalorder %s22, 1
      %p66 = por %p64, %p65
      %p68 = scmp.ne.s32.totalorder %s53, %s67
      %p69 = scmp.eq.s32.totalorder %s22, 0
      %p70 = por %p68, %p69
      %s72 = sadd.s32 %s71, 1
      %p75 = scmp.eq.s32.totalorder %s16, 1
      %p76 = scmp.ne.s32.totalorder %s71, %s73
      %p77 = scmp.eq.s32.totalorder %s16, 0
      %p78 = por %p76, %p77
      %p79 = scmp.ne.s32.totalorder %s71, %s73
      %p80 = scmp.eq.s32.totalorder %s21, 1
      %p81 = por %p79, %p80
      %p82 = scmp.ne.s32.totalorder %s73, %s74
      %p83 = scmp.eq.s32.totalorder %s21, 0
      %p84 = por %p82, %p83
      %p85 = scmp.ne.s32.totalorder %s73, %s74
      %p86 = scmp.eq.s32.totalorder %s22, 1
      %p87 = por %p85, %p86
      %p89 = scmp.ne.s32.totalorder %s74, %s88
      %p90 = scmp.eq.s32.totalorder %s22, 0
      %p91 = por %p89, %p90
      %s92 = ssub.s32 %s16, %s23
      %p93 = scmp.eq.s32.totalorder %s92, 0
      %s95 = sadd.s32 %s94, 1
      %s96 = scalar_select %p93, %s94, %s95
      %p99 = pneg %p93
      %p100 = scmp.eq.s32.totalorder %s16, 1
      %p101 = por %p99, %p100
      %p102 = scmp.ne.s32.totalorder %s94, %s97
      %p103 = scmp.eq.s32.totalorder %s16, 0
      %p104 = por %p102, %p103
      %p105 = scmp.ne.s32.totalorder %s94, %s97
      %p106 = scmp.eq.s32.totalorder %s21, 1
      %p107 = por %p105, %p106
      %p108 = scmp.ne.s32.totalorder %s97, %s98
      %p109 = scmp.eq.s32.totalorder %s21, 0
      %p110 = por %p108, %p109
      %p111 = scmp.ne.s32.totalorder %s97, %s98
      %p112 = scmp.eq.s32.totalorder %s22, 1
      %p113 = por %p111, %p112
      %p115 = scmp.ne.s32.totalorder %s98, %s114
      %p116 = scmp.eq.s32.totalorder %s22, 0
      %p117 = por %p115, %p116
      %p118 = scmp.le.s32.totalorder 1, %s16
      %p119 = scmp.lt.s32.totalorder %s16, 3
      %p120 = pnand %p118, %p119
      %p121 = pneg %p120
      // Predicated region
      $region9: #{tpu_custom_call.1} parent=5 // pred_check
        _
      $region10: #{tpu_custom_call.1} parent=5 // pred_check_branch
        %123 = sbr.rel (%p120) target = $region12
      $region11: #{tpu_custom_call.1} parent=5 // pred_region
        %s124 = ssub.s32 %s16, 1
        // Predicated region
        $region13: #{tpu_custom_call.1} parent=11 // pred_check
          %p125 = pneg %p63
        $region14: #{tpu_custom_call.1} parent=11 // pred_check_branch
          %127 = sbr.rel (%p125) target = $region16
        $region15: #{tpu_custom_call.1} parent=11 // pred_region
          %s129 = ssub.s32 3072, 3072
          %130 = vsyncadd [#allocation6], %s129
          %s131 = sshll.u32 [#allocation5], 4
          %s132 = int_to_ptr.vmem [resolvable:$true] %s131
          %137 = dma.hbm_to_vmem [thread:$0]  %s1, 3072, %s132, [#allocation6], 192, 192, 12
        $region16: #{tpu_custom_call.1} parent=11 // pred_fallthru
          _
        // Predicated region
        $region17: #{tpu_custom_call.1} parent=11 // pred_check
          %p138 = pneg %p84
        $region18: #{tpu_custom_call.1} parent=11 // pred_check_branch
          %140 = sbr.rel (%p138) target = $region20
        $region19: #{tpu_custom_call.1} parent=11 // pred_region
          _
        $region20: #{tpu_custom_call.1} parent=11 // pred_fallthru
          _
      $region12: #{tpu_custom_call.1} parent=5 // pred_fallthru
        _
      %p141 = scmp.lt.s32.totalorder %s16, 2
      // Predicated region
      $region21: #{tpu_custom_call.1} parent=5 // pred_check
        %p142 = pneg %p141
      $region22: #{tpu_custom_call.1} parent=5 // pred_check_branch
        %144 = sbr.rel (%p142) target = $region24
      $region23: #{tpu_custom_call.1} parent=5 // pred_region
        // Predicated region
        $region25: #{tpu_custom_call.1} parent=23 // pred_check
          %p145 = pneg %p36
        $region26: #{tpu_custom_call.1} parent=23 // pred_check_branch
          %147 = sbr.rel (%p145) target = $region28
        $region27: #{tpu_custom_call.1} parent=23 // pred_region
          %s148 = sand.u32 %s26, 1
          %s149 = scalar_lea.sflag [#allocation3], %s148
          %s150 = sand.u32 %s26, 1
          %s151 = smul.addr %s150, 8
          %s152 = scalar_lea.vmem [#allocation2], %s151
          %s154 = ssub.s32 128, 128
          %155 = vsyncadd %s149, %s154
          %s156 = smul.addr %s16, 128
          %s157 = scalar_lea.hbm %s0, %s156
          %s159 = sshll.u32 %s152, 4
          %s160 = int_to_ptr.vmem [resolvable:$true] %s159
          %162 = dma.hbm_to_vmem [thread:$0]  %s157, 128, %s160, %s149
        $region28: #{tpu_custom_call.1} parent=23 // pred_fallthru
          _
      $region24: #{tpu_custom_call.1} parent=5 // pred_fallthru
        _
      %p163 = scmp.le.s32.totalorder 1, %s16
      %p164 = scmp.lt.s32.totalorder %s16, 3
      %p165 = pnand %p163, %p164
      %p166 = pneg %p165
      // Predicated region
      $region29: #{tpu_custom_call.1} parent=5 // pred_check
        _
      $region30: #{tpu_custom_call.1} parent=5 // pred_check_branch
        %168 = sbr.rel (%p165) target = $region32
      $region31: #{tpu_custom_call.1} parent=5 // pred_region
        %s169 = ssub.s32 %s16, 1
        %s170 = sand.u32 %s29, 1
        %s171 = scalar_lea.sflag [#allocation3], %s170
        %s172 = sand.u32 %s29, 1
        %s173 = smul.addr %s172, 8
        %s174 = scalar_lea.vmem [#allocation2], %s173
        // Predicated region
        $region33: #{tpu_custom_call.1} parent=31 // pred_check
          %p175 = pneg %p42
        $region34: #{tpu_custom_call.1} parent=31 // pred_check_branch
          %177 = sbr.rel (%p175) target = $region36
        $region35: #{tpu_custom_call.1} parent=31 // pred_region
          %178 = dma.done %s171, 128
        $region36: #{tpu_custom_call.1} parent=31 // pred_fallthru
          _
        // Predicated region
        $region37: #{tpu_custom_call.1} parent=31 // pred_check
          %p179 = pneg %p63
        $region38: #{tpu_custom_call.1} parent=31 // pred_check_branch
          %181 = sbr.rel (%p179) target = $region40
        $region39: #{tpu_custom_call.1} parent=31 // pred_region
          %182 = dma.done [#allocation6], 3072
        $region40: #{tpu_custom_call.1} parent=31 // pred_fallthru
          _
        %s183 = sand.u32 %s29, 1
        %s184 = scalar_lea.sflag [#allocation3], %s183
        %s185 = sand.u32 %s29, 1
        %s186 = smul.addr %s185, 8
        %s187 = scalar_lea.vmem [#allocation2], %s186
        %p188 = pneg %p42
        %p189 = pneg %p39
        %p190 = pneg %p63
        %p191 = pneg %p60
        %p192 = pneg %p84
        %p193 = pneg %p81
        %p194 = pneg %p110
        %p195 = pneg %p107
        %s196 = sand.u32 %s97, 1
        %s197 = scalar_lea.sflag [#allocation4], %s196
        %s198 = sand.u32 %s97, 1
        %s199 = smul.addr %s198, 8
        %s200 = scalar_lea.vmem [#allocation7], %s199
        %v202 = vld [vmem:[%s174] sm:$0xff]
        %v203 = vld [vmem:[#allocation5] sm:$0xff]
        %v204 = vld [vmem:[#allocation5 + $0x8] sm:$0xf]
        %v205 = vld [vmem:[#allocation5 + $0xc] sm:$0xff]
        %v206 = vld [vmem:[#allocation5 + $0x14] sm:$0xf]
        %v207 = vld [vmem:[#allocation5 + $0x18] sm:$0xff]
        %v208 = vld [vmem:[#allocation5 + $0x20] sm:$0xf]
        %v209 = vld [vmem:[#allocation5 + $0x24] sm:$0xff]
        %v210 = vld [vmem:[#allocation5 + $0x2c] sm:$0xf]
        %v211 = vld [vmem:[#allocation5 + $0x30] sm:$0xff]
        %v212 = vld [vmem:[#allocation5 + $0x38] sm:$0xf]
        %v213 = vld [vmem:[#allocation5 + $0x3c] sm:$0xff]
        %v214 = vld [vmem:[#allocation5 + $0x44] sm:$0xf]
        %v215 = vld [vmem:[#allocation5 + $0x48] sm:$0xff]
        %v216 = vld [vmem:[#allocation5 + $0x50] sm:$0xf]
        %v217 = vld [vmem:[#allocation5 + $0x54] sm:$0xff]
        %v218 = vld [vmem:[#allocation5 + $0x5c] sm:$0xf]
        %v219 = vld [vmem:[#allocation5 + $0x60] sm:$0xff]
        %v220 = vld [vmem:[#allocation5 + $0x68] sm:$0xf]
        %v221 = vld [vmem:[#allocation5 + $0x6c] sm:$0xff]
        %v222 = vld [vmem:[#allocation5 + $0x74] sm:$0xf]
        %v223 = vld [vmem:[#allocation5 + $0x78] sm:$0xff]
        %v224 = vld [vmem:[#allocation5 + $0x80] sm:$0xf]
        %v225 = vld [vmem:[#allocation5 + $0x84] sm:$0xff]
        %v226 = vld [vmem:[#allocation5 + $0x8c] sm:$0xf]
        %v227 = vld [vmem:[#allocation5 + $0x90] sm:$0xff]
        %v228 = vld [vmem:[#allocation5 + $0x98] sm:$0xf]
        %v229 = vld [vmem:[#allocation5 + $0x9c] sm:$0xff]
        %v230 = vld [vmem:[#allocation5 + $0xa4] sm:$0xf]
        %v231 = vld [vmem:[#allocation5 + $0xa8] sm:$0xff]
        %v232 = vld [vmem:[#allocation5 + $0xb0] sm:$0xf]
        %v233 = vld [vmem:[#allocation5 + $0xb4] sm:$0xff]
        %v234 = vld [vmem:[#allocation5 + $0xbc] sm:$0xf]
        %v235 = vld [vmem:[%s2] sm:$0x7]
        %v236 = vpack.c.bf16 %v202, %v202
        %v238 = vlaneseq
        %v239 = vshrl.u32 %v238, 7
        %v240 = vsub.s32 0, %v239
        %v241 = vrot.slane %v235, %v240
        %v242 = vlaneseq
        %v243 = vshrl.u32 %v242, 7
        %v244 = vsub.s32 1, %v243
        %v245 = vrot.slane %v235, %v244
        %v246 = vlaneseq
        %v247 = vshrl.u32 %v246, 7
        %v248 = vsub.s32 2, %v247
        %v249 = vrot.slane %v235, %v248
        %v285 = vunpack.c.l.b16 %v203
        %v286 = vunpack.c.h.b16 %v203
        %v287 = vunpack.c.l.b16 %v204
        %v288 = vunpack.c.l.b16 %v205
        %v289 = vunpack.c.h.b16 %v205
        %v290 = vunpack.c.l.b16 %v206
        %v291 = vunpack.c.l.b16 %v207
        %v292 = vunpack.c.h.b16 %v207
        %v293 = vunpack.c.l.b16 %v208
        %v294 = vunpack.c.l.b16 %v209
        %v295 = vunpack.c.h.b16 %v209
        %v296 = vunpack.c.l.b16 %v210
        %v297 = vunpack.c.l.b16 %v211
        %v298 = vunpack.c.h.b16 %v211
        %v299 = vunpack.c.l.b16 %v212
        %v300 = vunpack.c.l.b16 %v213
        %v301 = vunpack.c.h.b16 %v213
        %v302 = vunpack.c.l.b16 %v214
        %v303 = vunpack.c.l.b16 %v215
        %v304 = vunpack.c.h.b16 %v215
        %v305 = vunpack.c.l.b16 %v216
        %v306 = vunpack.c.l.b16 %v217
        %v307 = vunpack.c.h.b16 %v217
        %v308 = vunpack.c.l.b16 %v218
        %v309 = vunpack.c.l.b16 %v219
        %v310 = vunpack.c.h.b16 %v219
        %v311 = vunpack.c.l.b16 %v220
        %v312 = vunpack.c.l.b16 %v221
        %v313 = vunpack.c.h.b16 %v221
        %v314 = vunpack.c.l.b16 %v222
        %v315 = vunpack.c.l.b16 %v223
        %v316 = vunpack.c.h.b16 %v223
        %v317 = vunpack.c.l.b16 %v224
        %v318 = vunpack.c.l.b16 %v225
        %v319 = vunpack.c.h.b16 %v225
        %v320 = vunpack.c.l.b16 %v226
        %v321 = vunpack.c.l.b16 %v227
        %v322 = vunpack.c.h.b16 %v227
        %v323 = vunpack.c.l.b16 %v228
        %v324 = vunpack.c.l.b16 %v229
        %v325 = vunpack.c.h.b16 %v229
        %v326 = vunpack.c.l.b16 %v230
        %v327 = vunpack.c.l.b16 %v231
        %v328 = vunpack.c.h.b16 %v231
        %v329 = vunpack.c.l.b16 %v232
        %v330 = vunpack.c.l.b16 %v233
        %v331 = vunpack.c.h.b16 %v233
        %v332 = vunpack.c.l.b16 %v234
        %v333 = vpack.c.b16 %v288, %v285
        %v334 = vpack.c.b16 %v289, %v286
        %v335 = vpack.c.b16 %v290, %v287
        %v336 = vpack.c.b16 %v294, %v291
        %v337 = vpack.c.b16 %v295, %v292
        %v338 = vpack.c.b16 %v296, %v293
        %v339 = vpack.c.b16 %v300, %v297
        %v340 = vpack.c.b16 %v301, %v298
        %v341 = vpack.c.b16 %v302, %v299
        %v342 = vpack.c.b16 %v306, %v303
        %v343 = vpack.c.b16 %v307, %v304
        %v344 = vpack.c.b16 %v308, %v305
        %v345 = vpack.c.b16 %v312, %v309
        %v346 = vpack.c.b16 %v313, %v310
        %v347 = vpack.c.b16 %v314, %v311
        %v348 = vpack.c.b16 %v318, %v315
        %v349 = vpack.c.b16 %v319, %v316
        %v350 = vpack.c.b16 %v320, %v317
        %v351 = vpack.c.b16 %v324, %v321
        %v352 = vpack.c.b16 %v325, %v322
        %v353 = vpack.c.b16 %v326, %v323
        %v354 = vpack.c.b16 %v330, %v327
        %v355 = vpack.c.b16 %v331, %v328
        %v356 = vpack.c.b16 %v332, %v329
        %381 = vmatprep.subr.bf16.mxu0 %v334
        %382 = vmatpush1.bf16.msra.mxu0 %v333
        %383 = vmatprep.subr.bf16.mxu0 %v337
        %384 = vmatpush1.bf16.msra.mxu0 %v336
        %385 = vmatprep.subr.bf16.mxu0 %v340
        %386 = vmatpush1.bf16.msra.mxu0 %v339
        %387 = vmatprep.subr.bf16.mxu0 %v343
        %388 = vmatpush1.bf16.msra.mxu0 %v342
        %389 = vmatprep.subr.bf16.mxu0 %v346
        %390 = vmatpush1.bf16.msra.mxu0 %v345
        %391 = vmatprep.subr.bf16.mxu0 %v349
        %392 = vmatpush1.bf16.msra.mxu0 %v348
        %393 = vmatprep.subr.bf16.mxu0 %v352
        %394 = vmatpush1.bf16.msra.mxu0 %v351
        %395 = vmatprep.subr.bf16.mxu0 %v355
        %396 = vmatpush1.bf16.msra.mxu0 %v354
        %397 = vmatprep.subr.bf16.mxu0 0
        %398 = vmatpush1.bf16.msra.mxu0 0
        %399 = vmatprep.subr.bf16.mxu0 0
        %400 = vmatpush1.bf16.msra.mxu0 0
        %401 = vmatprep.subr.bf16.mxu0 0
        %402 = vmatpush1.bf16.msra.mxu0 0
        %403 = vmatprep.subr.bf16.mxu0 0
        %404 = vmatpush1.bf16.msra.mxu0 0
        %405 = vmatprep.subr.bf16.mxu0 0
        %406 = vmatpush1.bf16.msra.mxu0 0
        %407 = vmatprep.subr.bf16.mxu0 0
        %408 = vmatpush1.bf16.msra.mxu0 0
        %409 = vmatprep.subr.bf16.mxu0 0
        %410 = vmatpush1.bf16.msra.mxu0 0
        %411 = vmatprep.subr.bf16.mxu0 0
        %412 = vmatpush1.bf16.msra.mxu0 0
        %413 = vmatprep.mubr.bf16.mxu0 0
        %414 = vmatmul.mubr.bf16.gmra.mrb[0].mxu0 %v236
        %v415 = vpop.f32.mrb[0].mxu0
        %v416 = vadd.f32 %v241, %v415
        %v417 = vpop.f32.mrb[0].mxu0
        %v418 = vadd.f32 %v245, %v417
        %v419 = vpop.f32.mrb[0].mxu0
        %v420 = vpop.f32.mrb[0].mxu0
        %421 = vdwg.mxu0
        %422 = vmatprep.subr.bf16.mxu0 0
        %423 = vmatpush1.bf16.msra.mxu0 %v335
        %424 = vmatprep.subr.bf16.mxu0 0
        %425 = vmatpush1.bf16.msra.mxu0 %v338
        %426 = vmatprep.subr.bf16.mxu0 0
        %427 = vmatpush1.bf16.msra.mxu0 %v341
        %428 = vmatprep.subr.bf16.mxu0 0
        %429 = vmatpush1.bf16.msra.mxu0 %v344
        %430 = vmatprep.subr.bf16.mxu0 0
        %431 = vmatpush1.bf16.msra.mxu0 %v347
        %432 = vmatprep.subr.bf16.mxu0 0
        %433 = vmatpush1.bf16.msra.mxu0 %v350
        %434 = vmatprep.subr.bf16.mxu0 0
        %435 = vmatpush1.bf16.msra.mxu0 %v353
        %436 = vmatprep.subr.bf16.mxu0 0
        %437 = vmatpush1.bf16.msra.mxu0 %v356
        %438 = vmatprep.subr.bf16.mxu0 0
        %439 = vmatpush1.bf16.msra.mxu0 0
        %440 = vmatprep.subr.bf16.mxu0 0
        %441 = vmatpush1.bf16.msra.mxu0 0
        %442 = vmatprep.subr.bf16.mxu0 0
        %443 = vmatpush1.bf16.msra.mxu0 0
        %444 = vmatprep.subr.bf16.mxu0 0
        %445 = vmatpush1.bf16.msra.mxu0 0
        %446 = vmatprep.subr.bf16.mxu0 0
        %447 = vmatpush1.bf16.msra.mxu0 0
        %448 = vmatprep.subr.bf16.mxu0 0
        %449 = vmatpush1.bf16.msra.mxu0 0
        %450 = vmatprep.subr.bf16.mxu0 0
        %451 = vmatpush1.bf16.msra.mxu0 0
        %452 = vmatprep.subr.bf16.mxu0 0
        %453 = vmatpush1.bf16.msra.mxu0 0
        %454 = vmatprep.mubr.bf16.mxu0 0
        %455 = vmatmul.mubr.bf16.gmra.mrb[0].mxu0 %v236
        %v456 = vpop.f32.mrb[0].mxu0
        %v457 = vadd.f32 %v249, %v456
        %v458 = vpop.f32.mrb[0].mxu0
        %v459 = vpop.f32.mrb[0].mxu0
        %v460 = vpop.f32.mrb[0].mxu0
        %461 = vdwg.mxu0
        %v462 = vpack.c.bf16 %v416, %v416
        %v463 = vpack.c.bf16 %v418, %v418
        %v464 = vpack.c.bf16 %v457, %v457
        %465 = vmatprep.subr.bf16.mxu0 0
        %466 = vmatpush1.bf16.xpose.msra.mxu0 %v463
        %467 = vmatprep.subr.bf16.mxu0 0
        %468 = vmatpush1.bf16.xpose.msra.mxu0 0
        %469 = vmatprep.subr.bf16.mxu0 0
        %470 = vmatpush1.bf16.xpose.msra.mxu0 0
        %471 = vmatprep.subr.bf16.mxu0 0
        %472 = vmatpush1.bf16.xpose.msra.mxu0 0
        %473 = vmatprep.subr.bf16.mxu0 0
        %474 = vmatpush1.bf16.xpose.msra.mxu0 0
        %475 = vmatprep.subr.bf16.mxu0 0
        %476 = vmatpush1.bf16.xpose.msra.mxu0 0
        %477 = vmatprep.subr.bf16.mxu0 0
        %478 = vmatpush1.bf16.xpose.msra.mxu0 0
        %479 = vmatprep.subr.bf16.mxu0 0
        %480 = vmatpush1.bf16.xpose.msra.mxu0 0
        %481 = vmatprep.subr.bf16.mxu0 0
        %482 = vmatpush1.bf16.xpose.msra.mxu0 0
        %483 = vmatprep.subr.bf16.mxu0 0
        %484 = vmatpush1.bf16.xpose.msra.mxu0 0
        %485 = vmatprep.subr.bf16.mxu0 0
        %486 = vmatpush1.bf16.xpose.msra.mxu0 0
        %487 = vmatprep.subr.bf16.mxu0 0
        %488 = vmatpush1.bf16.xpose.msra.mxu0 0
        %489 = vmatprep.subr.bf16.mxu0 0
        %490 = vmatpush1.bf16.xpose.msra.mxu0 0
        %491 = vmatprep.subr.bf16.mxu0 0
        %492 = vmatpush1.bf16.xpose.msra.mxu0 0
        %493 = vmatprep.subr.bf16.mxu0 0
        %494 = vmatpush1.bf16.xpose.msra.mxu0 0
        %495 = vmatprep.subr.bf16.mxu0 0
        %496 = vmatpush1.bf16.xpose.msra.mxu0 0
        %497 = vmatprep.mubr.bf16.mxu0 0
        %498 = vmatmul.mubr.bf16.gmra.mrb[0].mxu0 %v462
        %v499 = vpop.f32.mrb[0].mxu0
        %v500 = vadd.f32 0.0, %v499
        %v501 = vpop.f32.mrb[0].mxu0
        %v502 = vpop.f32.mrb[0].mxu0
        %v503 = vpop.f32.mrb[0].mxu0
        %504 = vdwg.mxu0
        %vm505 = vcmask 64512
        %v506 = vsel %vm505, %v500, -inf
        %507 = vmax.xlane.f32.xlu0 %v506
        %v508 = vpop.xlane.xlu0 %507
        %v509 = vsub.f32 %v500, %v508
        %v510 = vmul.f32 %v509, 1.442695
        %v511 = vpow.pop %v510
        %v512 = vsel %vm505, %v511, 0.0
        %513 = vadd.xlane.f32.xlu0 %v512
        %v514 = vpop.xlane.xlu0 %513
        %v515 = vrcp.pop %v514
        %v516 = vmul.f32 %v511, %v515
        %v517 = vpack.c.bf16 %v516, %v516
        %v519 = vsel %vm505, %v517, 0
        %vm521 = vcmask 1043456
        %v523 = vsel %vm521, %v464, 0
        %525 = vmatprep.subr.bf16.mxu0 0
        %526 = vmatpush1.bf16.msra.mxu0 %v523
        %527 = vmatprep.subr.bf16.mxu0 0
        %528 = vmatpush1.bf16.msra.mxu0 0
        %529 = vmatprep.subr.bf16.mxu0 0
        %530 = vmatpush1.bf16.msra.mxu0 0
        %531 = vmatprep.subr.bf16.mxu0 0
        %532 = vmatpush1.bf16.msra.mxu0 0
        %533 = vmatprep.subr.bf16.mxu0 0
        %534 = vmatpush1.bf16.msra.mxu0 0
        %535 = vmatprep.subr.bf16.mxu0 0
        %536 = vmatpush1.bf16.msra.mxu0 0
        %537 = vmatprep.subr.bf16.mxu0 0
        %538 = vmatpush1.bf16.msra.mxu0 0
        %539 = vmatprep.subr.bf16.mxu0 0
        %540 = vmatpush1.bf16.msra.mxu0 0
        %541 = vmatprep.subr.bf16.mxu0 0
        %542 = vmatpush1.bf16.msra.mxu0 0
        %543 = vmatprep.subr.bf16.mxu0 0
        %544 = vmatpush1.bf16.msra.mxu0 0
        %545 = vmatprep.subr.bf16.mxu0 0
        %546 = vmatpush1.bf16.msra.mxu0 0
        %547 = vmatprep.subr.bf16.mxu0 0
        %548 = vmatpush1.bf16.msra.mxu0 0
        %549 = vmatprep.subr.bf16.mxu0 0
        %550 = vmatpush1.bf16.msra.mxu0 0
        %551 = vmatprep.subr.bf16.mxu0 0
        %552 = vmatpush1.bf16.msra.mxu0 0
        %553 = vmatprep.subr.bf16.mxu0 0
        %554 = vmatpush1.bf16.msra.mxu0 0
        %555 = vmatprep.subr.bf16.mxu0 0
        %556 = vmatpush1.bf16.msra.mxu0 0
        %557 = vmatprep.mubr.bf16.mxu0 0
        %558 = vmatmul.mubr.bf16.gmra.mrb[0].mxu0 %v519
        %v559 = vpop.f32.mrb[0].mxu0
        %v560 = vadd.f32 %v202, %v559
        %v561 = vpop.f32.mrb[0].mxu0
        %v562 = vpop.f32.mrb[0].mxu0
        %v563 = vpop.f32.mrb[0].mxu0
        %564 = vdwg.mxu0
        %565 = vst [vmem:[%s200] sm:$0xff] %v560
        %s566 = sand.u32 %s97, 1
        %s567 = scalar_lea.sflag [#allocation4], %s566
        %s568 = sand.u32 %s97, 1
        %s569 = smul.addr %s568, 8
        %s570 = scalar_lea.vmem [#allocation7], %s569
        // Predicated region
        $region41: #{tpu_custom_call.1} parent=31 // pred_check
          %p571 = pneg %p107
        $region42: #{tpu_custom_call.1} parent=31 // pred_check_branch
          %573 = sbr.rel (%p571) target = $region44
        $region43: #{tpu_custom_call.1} parent=31 // pred_region
          %s575 = ssub.s32 128, 128
          %576 = vsyncadd %s567, %s575
          %s577 = smul.addr %s21, 128
          %s578 = scalar_lea.hbm %s3, %s577
          %s580 = sshll.u32 %s570, 4
          %s581 = int_to_ptr.vmem [resolvable:$true] %s580
          %583 = dma.vmem_to_hbm [thread:$0]  %s581, 128, %s578, %s567
        $region44: #{tpu_custom_call.1} parent=31 // pred_fallthru
          _
      $region32: #{tpu_custom_call.1} parent=5 // pred_fallthru
        _
      %p584 = scmp.le.s32.totalorder 2, %s16
      // Predicated region
      $region45: #{tpu_custom_call.1} parent=5 // pred_check
        %p585 = pneg %p584
      $region46: #{tpu_custom_call.1} parent=5 // pred_check_branch
        %587 = sbr.rel (%p585) target = $region48
      $region47: #{tpu_custom_call.1} parent=5 // pred_region
        %s588 = ssub.s32 %s16, 2
        // Predicated region
        $region49: #{tpu_custom_call.1} parent=47 // pred_check
          %p589 = pneg %p113
        $region50: #{tpu_custom_call.1} parent=47 // pred_check_branch
          %591 = sbr.rel (%p589) target = $region52
        $region51: #{tpu_custom_call.1} parent=47 // pred_region
          %s592 = sand.u32 %s98, 1
          %s593 = scalar_lea.sflag [#allocation4], %s592
          %s594 = sand.u32 %s98, 1
          %s595 = smul.addr %s594, 8
          %s596 = scalar_lea.vmem [#allocation7], %s595
          %597 = dma.done %s593, 128
        $region52: #{tpu_custom_call.1} parent=47 // pred_fallthru
          _
      $region48: #{tpu_custom_call.1} parent=5 // pred_fallthru
        _
    $region6: #{tpu_custom_call.1} parent=1 // loop_footer
      %s20 = sadd.s32 1, %s16
    $region7: #{tpu_custom_call.1} parent=1 // loop_footer_branch
      %15 = sbr.rel target = $region3
    $region8: #{tpu_custom_call.1} parent=1 // loop_exit
      _
    %598 = vsyncpa [#allocation3], 1
    %s599 = scalar_lea.sflag [#allocation3], 1
    %600 = vsyncpa %s599, 1
    %601 = vsyncpa [#allocation6], 1
    %602 = vsyncpa [#allocation4], 1
    %s603 = scalar_lea.sflag [#allocation4], 1
    %604 = vsyncpa %s603, 1

</llo_original>
